<compile_context>
chip_gen: v7x
topology: tpu7x:2x2x1
jax: 0.10.0
libtpu: 0.0.40
codegen_flags: <defaults>
</compile_context>

<pallas_src>
import math

import jax
import jax.numpy as jnp
from jax.experimental import pallas as pl
from jax.experimental.pallas import tpu as pltpu


def _round_up(x, m):
    return ((x + m - 1) // m) * m


def _critic_kernel(x_ref, w1_ref, b1_ref, w2_ref, b2_ref, w3_ref, b3_ref,
                   w4_ref, b4_ref, o_ref):
    """Fused 4-layer relu-MLP on one batch-row tile."""
    h = x_ref[...].astype(jnp.float32)
    for w_ref, b_ref in ((w1_ref, b1_ref), (w2_ref, b2_ref),
                         (w3_ref, b3_ref), (w4_ref, b4_ref)):
        h = jnp.dot(h, w_ref[...], preferred_element_type=jnp.float32)
        h = jnp.maximum(h + b_ref[...], 0.0)
    o_ref[...] = h.astype(o_ref.dtype)


def critic_net_forward(x, params, *, tm=512):
    """relu(fc4(relu(fc3(relu(fc2(relu(fc1(x)))))))) in one Pallas kernel.

    params = ((w1, b1), (w2, b2), (w3, b3), (w4, b4)); weights are
    (in_features, out_features), biases are (out_features,).
    """
    b, d_in = x.shape
    (w1, b1), (w2, b2), (w3, b3), (w4, b4) = params
    assert w1.shape[0] == d_in
    assert w2.shape[0] == w1.shape[1]
    assert w3.shape[0] == w2.shape[1]
    assert w4.shape[0] == w3.shape[1]
    d_out = w4.shape[1]

    # Row tile: large enough to feed the MXU and amortize per-step overhead,
    # clamped (to a sublane-aligned size) so a small batch is a single step.
    tm_eff = min(tm, _round_up(b, 8))
    b_pad = _round_up(b, tm_eff)
    if b_pad != b:
        x = jnp.pad(x, ((0, b_pad - b), (0, 0)))
    grid = (b_pad // tm_eff,)

    # Biases as (1, out) so they sit lane-major in VMEM and broadcast cleanly.
    b1r, b2r, b3r, b4r = (bb.reshape(1, -1) for bb in (b1, b2, b3, b4))

    def const_spec(a):
        # Grid-invariant operand: full-extent block, constant index_map
        # (loaded into VMEM once, never re-DMA'd across grid steps).
        return pl.BlockSpec(a.shape, lambda i: (0, 0))

    flops = 2 * b_pad * (w1.shape[0] * w1.shape[1] + w2.shape[0] * w2.shape[1]
                         + w3.shape[0] * w3.shape[1] + w4.shape[0] * w4.shape[1])
    bytes_accessed = 4 * (x.size + w1.size + w2.size + w3.size + w4.size
                          + b1.size + b2.size + b3.size + b4.size
                          + b_pad * d_out)

    out = pl.pallas_call(
        _critic_kernel,
        out_shape=jax.ShapeDtypeStruct((b_pad, d_out), jnp.float32),
        grid=grid,
        in_specs=[
            pl.BlockSpec((tm_eff, d_in), lambda i: (i, 0)),   # x row tile
            const_spec(w1), const_spec(b1r),
            const_spec(w2), const_spec(b2r),
            const_spec(w3), const_spec(b3r),
            const_spec(w4), const_spec(b4r),
        ],
        out_specs=pl.BlockSpec((tm_eff, d_out), lambda i: (i, 0)),
        compiler_params=pltpu.CompilerParams(
            dimension_semantics=("parallel",),        # megacore sharding on v7x
            vmem_limit_bytes=32 * 1024 * 1024,        # safe on v5e/v6e/v7x
        ),
        cost_estimate=pl.CostEstimate(
            flops=int(flops), transcendentals=0,
            bytes_accessed=int(bytes_accessed)),
    )(x, w1, b1r, w2, b2r, w3, b3r, w4, b4r)

    return out[:b]


def init_linear(key, fan_in, fan_out, dtype=jnp.float32):
    """Matches nn.init.kaiming_uniform_(mode='fan_in', nonlinearity='relu')
    on the weight (bound = sqrt(6 / fan_in)) and zeros_ on the bias.
    Weight is stored (in_features, out_features)."""
    bound = math.sqrt(6.0 / fan_in)
    w = jax.random.uniform(key, (fan_in, fan_out), dtype=dtype,
                           minval=-bound, maxval=bound)
    b = jnp.zeros((fan_out,), dtype=dtype)
    return w, b


if __name__ == "__main__":
    key = jax.random.PRNGKey(0)
    k_x, k1, k2, k3, k4 = jax.random.split(key, 5)

    INPUT_DIM = 64      # -> hidden dims 16, 8, 4, output 1
    BATCH = 8
    dims = [INPUT_DIM, INPUT_DIM // 4, INPUT_DIM // 8, INPUT_DIM // 16, 1]

    params = tuple(
        init_linear(k, fi, fo)
        for k, (fi, fo) in zip((k1, k2, k3, k4), zip(dims[:-1], dims[1:]))
    )

    x = jax.random.normal(k_x, (BATCH, INPUT_DIM), dtype=jnp.float32)

    out = critic_net_forward(x, params)
    out = jax.block_until_ready(out)

    # Pure-JAX reference of the PyTorch forward pass.
    ref = x
    for w, b in params:
        ref = jnp.maximum(ref @ w + b, 0.0)

    assert out.shape == (BATCH, 1)
    assert jnp.allclose(out, ref, atol=1e-5, rtol=1e-5)

    print("KERNEL_OK")
</pallas_src>

<mosaic_0001>
module attributes {stable_mosaic.version = 11 : i64} {
  func.func @_critic_kernel(%arg0: i32, %arg1: memref<8x64xf32, #tpu.memory_space<vmem>>, %arg2: memref<64x16xf32, #tpu.memory_space<vmem>>, %arg3: memref<1x16xf32, #tpu.memory_space<vmem>>, %arg4: memref<16x8xf32, #tpu.memory_space<vmem>>, %arg5: memref<1x8xf32, #tpu.memory_space<vmem>>, %arg6: memref<8x4xf32, #tpu.memory_space<vmem>>, %arg7: memref<1x4xf32, #tpu.memory_space<vmem>>, %arg8: memref<4x1xf32, #tpu.memory_space<vmem>>, %arg9: memref<1x1xf32, #tpu.memory_space<vmem>>, %arg10: memref<8x1xf32, #tpu.memory_space<vmem>>) attributes {dimension_semantics = [#tpu.dimension_semantics<parallel>], iteration_bounds = array<i64: 1>, scalar_prefetch = 0 : i64, scratch_operands = 0 : i64, tpu.core_type = #tpu.core_type<tc>, window_params = [{transform_indices = @transform_0, window_bounds = array<i64: 8, 64>}, {pipeline_mode = #tpu.pipeline_mode<synchronous>, transform_indices = @transform_1, window_bounds = array<i64: 64, 16>}, {pipeline_mode = #tpu.pipeline_mode<synchronous>, transform_indices = @transform_2, window_bounds = array<i64: 1, 16>}, {pipeline_mode = #tpu.pipeline_mode<synchronous>, transform_indices = @transform_3, window_bounds = array<i64: 16, 8>}, {pipeline_mode = #tpu.pipeline_mode<synchronous>, transform_indices = @transform_4, window_bounds = array<i64: 1, 8>}, {pipeline_mode = #tpu.pipeline_mode<synchronous>, transform_indices = @transform_5, window_bounds = array<i64: 8, 4>}, {pipeline_mode = #tpu.pipeline_mode<synchronous>, transform_indices = @transform_6, window_bounds = array<i64: 1, 4>}, {pipeline_mode = #tpu.pipeline_mode<synchronous>, transform_indices = @transform_7, window_bounds = array<i64: 4, 1>}, {pipeline_mode = #tpu.pipeline_mode<synchronous>, transform_indices = @transform_8, window_bounds = array<i64: 1, 1>}, {transform_indices = @transform_9, window_bounds = array<i64: 8, 1>}]} {
    %c0 = arith.constant 0 : index
    %c0_0 = arith.constant 0 : index
    %0 = vector.load %arg1[%c0, %c0_0] : memref<8x64xf32, #tpu.memory_space<vmem>>, vector<8x64xf32>
    %c0_1 = arith.constant 0 : index
    %c0_2 = arith.constant 0 : index
    %1 = vector.load %arg2[%c0_1, %c0_2] : memref<64x16xf32, #tpu.memory_space<vmem>>, vector<64x16xf32>
    %cst = arith.constant dense<0.000000e+00> : vector<8x16xf32>
    %2 = tpu.matmul %0, %1, %cst {dimension_numbers = #tpu.dot_dimension_numbers<[1], [0], [0], [1], [0, 0, 1, 1], [], []>} : vector<8x64xf32>, vector<64x16xf32>, vector<8x16xf32> -> vector<8x16xf32>
    %c0_3 = arith.constant 0 : index
    %c0_4 = arith.constant 0 : index
    %3 = vector.load %arg3[%c0_3, %c0_4] : memref<1x16xf32, #tpu.memory_space<vmem>>, vector<1x16xf32>
    %4 = vector.broadcast %3 : vector<1x16xf32> to vector<8x16xf32>
    %5 = arith.addf %2, %4 : vector<8x16xf32>
    %cst_5 = arith.constant 0.000000e+00 : f32
    %6 = vector.broadcast %cst_5 : f32 to vector<8x16xf32>
    %7 = arith.maximumf %5, %6 : vector<8x16xf32>
    %c0_6 = arith.constant 0 : index
    %c0_7 = arith.constant 0 : index
    %8 = vector.load %arg4[%c0_6, %c0_7] : memref<16x8xf32, #tpu.memory_space<vmem>>, vector<16x8xf32>
    %cst_8 = arith.constant dense<0.000000e+00> : vector<8x8xf32>
    %9 = tpu.matmul %7, %8, %cst_8 {dimension_numbers = #tpu.dot_dimension_numbers<[1], [0], [0], [1], [0, 0, 1, 1], [], []>} : vector<8x16xf32>, vector<16x8xf32>, vector<8x8xf32> -> vector<8x8xf32>
    %c0_9 = arith.constant 0 : index
    %c0_10 = arith.constant 0 : index
    %10 = vector.load %arg5[%c0_9, %c0_10] : memref<1x8xf32, #tpu.memory_space<vmem>>, vector<1x8xf32>
    %11 = vector.broadcast %10 : vector<1x8xf32> to vector<8x8xf32>
    %12 = arith.addf %9, %11 : vector<8x8xf32>
    %cst_11 = arith.constant 0.000000e+00 : f32
    %13 = vector.broadcast %cst_11 : f32 to vector<8x8xf32>
    %14 = arith.maximumf %12, %13 : vector<8x8xf32>
    %c0_12 = arith.constant 0 : index
    %c0_13 = arith.constant 0 : index
    %15 = vector.load %arg6[%c0_12, %c0_13] : memref<8x4xf32, #tpu.memory_space<vmem>>, vector<8x4xf32>
    %cst_14 = arith.constant dense<0.000000e+00> : vector<8x4xf32>
    %16 = tpu.matmul %14, %15, %cst_14 {dimension_numbers = #tpu.dot_dimension_numbers<[1], [0], [0], [1], [0, 0, 1, 1], [], []>} : vector<8x8xf32>, vector<8x4xf32>, vector<8x4xf32> -> vector<8x4xf32>
    %c0_15 = arith.constant 0 : index
    %c0_16 = arith.constant 0 : index
    %17 = vector.load %arg7[%c0_15, %c0_16] : memref<1x4xf32, #tpu.memory_space<vmem>>, vector<1x4xf32>
    %18 = vector.broadcast %17 : vector<1x4xf32> to vector<8x4xf32>
    %19 = arith.addf %16, %18 : vector<8x4xf32>
    %cst_17 = arith.constant 0.000000e+00 : f32
    %20 = vector.broadcast %cst_17 : f32 to vector<8x4xf32>
    %21 = arith.maximumf %19, %20 : vector<8x4xf32>
    %c0_18 = arith.constant 0 : index
    %c0_19 = arith.constant 0 : index
    %22 = vector.load %arg8[%c0_18, %c0_19] : memref<4x1xf32, #tpu.memory_space<vmem>>, vector<4x1xf32>
    %cst_20 = arith.constant dense<0.000000e+00> : vector<8x1xf32>
    %23 = tpu.matmul %21, %22, %cst_20 {dimension_numbers = #tpu.dot_dimension_numbers<[1], [0], [0], [1], [0, 0, 1, 1], [], []>} : vector<8x4xf32>, vector<4x1xf32>, vector<8x1xf32> -> vector<8x1xf32>
    %c0_21 = arith.constant 0 : index
    %c0_22 = arith.constant 0 : index
    %24 = vector.load %arg9[%c0_21, %c0_22] : memref<1x1xf32, #tpu.memory_space<vmem>>, vector<1x1xf32>
    %25 = vector.broadcast %24 : vector<1x1xf32> to vector<8x1xf32>
    %26 = arith.addf %23, %25 : vector<8x1xf32>
    %cst_23 = arith.constant 0.000000e+00 : f32
    %27 = vector.broadcast %cst_23 : f32 to vector<8x1xf32>
    %28 = arith.maximumf %26, %27 : vector<8x1xf32>
    %c0_24 = arith.constant 0 : index
    %c0_25 = arith.constant 0 : index
    %29 = vector.load %arg10[%c0_24, %c0_25] : memref<8x1xf32, #tpu.memory_space<vmem>>, vector<8x1xf32>
    tpu.vector_store %arg10[%c0_24, %c0_25], %28 {strides = array<i32>} : memref<8x1xf32, #tpu.memory_space<vmem>>, vector<8x1xf32>,
    return
  }
  func.func @transform_0(%arg0: i32) -> (i32, i32) {
    %c0_i32 = arith.constant 0 : i32
    %c0_i32_0 = arith.constant 0 : i32
    return %arg0, %c0_i32 : i32, i32
  }
  func.func @transform_1(%arg0: i32) -> (i32, i32) {
    %c0_i32 = arith.constant 0 : i32
    %c0_i32_0 = arith.constant 0 : i32
    %c0_i32_1 = arith.constant 0 : i32
    return %c0_i32, %c0_i32_0 : i32, i32
  }
  func.func @transform_2(%arg0: i32) -> (i32, i32) {
    %c0_i32 = arith.constant 0 : i32
    %c0_i32_0 = arith.constant 0 : i32
    %c0_i32_1 = arith.constant 0 : i32
    return %c0_i32, %c0_i32_0 : i32, i32
  }
  func.func @transform_3(%arg0: i32) -> (i32, i32) {
    %c0_i32 = arith.constant 0 : i32
    %c0_i32_0 = arith.constant 0 : i32
    %c0_i32_1 = arith.constant 0 : i32
    return %c0_i32, %c0_i32_0 : i32, i32
  }
  func.func @transform_4(%arg0: i32) -> (i32, i32) {
    %c0_i32 = arith.constant 0 : i32
    %c0_i32_0 = arith.constant 0 : i32
    %c0_i32_1 = arith.constant 0 : i32
    return %c0_i32, %c0_i32_0 : i32, i32
  }
  func.func @transform_5(%arg0: i32) -> (i32, i32) {
    %c0_i32 = arith.constant 0 : i32
    %c0_i32_0 = arith.constant 0 : i32
    %c0_i32_1 = arith.constant 0 : i32
    return %c0_i32, %c0_i32_0 : i32, i32
  }
  func.func @transform_6(%arg0: i32) -> (i32, i32) {
    %c0_i32 = arith.constant 0 : i32
    %c0_i32_0 = arith.constant 0 : i32
    %c0_i32_1 = arith.constant 0 : i32
    return %c0_i32, %c0_i32_0 : i32, i32
  }
  func.func @transform_7(%arg0: i32) -> (i32, i32) {
    %c0_i32 = arith.constant 0 : i32
    %c0_i32_0 = arith.constant 0 : i32
    %c0_i32_1 = arith.constant 0 : i32
    return %c0_i32, %c0_i32_0 : i32, i32
  }
  func.func @transform_8(%arg0: i32) -> (i32, i32) {
    %c0_i32 = arith.constant 0 : i32
    %c0_i32_0 = arith.constant 0 : i32
    %c0_i32_1 = arith.constant 0 : i32
    return %c0_i32, %c0_i32_0 : i32, i32
  }
  func.func @transform_9(%arg0: i32) -> (i32, i32) {
    %c0_i32 = arith.constant 0 : i32
    %c0_i32_0 = arith.constant 0 : i32
    return %arg0, %c0_i32 : i32, i32
  }
}

</mosaic_0001>

<llo_original>
// kernel: tpu_custom_call.1
$region0: #{tpu_custom_call.1}
  #allocation0 [shape = 'u32[]', space=smem, size = 0x4, offset = 0x4, fixed_abs, tag = 'smem constant byte address 0x4 - core index']
  #allocation1 [shape = 'u32[144,128]{1,0:T(1,128)}', space=vmem, size = 0x12000, scoped, tag = 'internal scratch']
  #allocation2 [shape = 'f32[1,1]{1,0:T(1,128)S(1)}', space=vmem, size = 0x200, scoped, tag = 'scoped memory for tpu_custom_call.1']
  %s0 = inlined_call_operand.vmem [shape: f32[8,64], index: 0, kind: input, shape index: {}]
  %s1 = inlined_call_operand.vmem [shape: f32[64,16], index: 1, kind: input, shape index: {}]
  %s2 = inlined_call_operand.vmem [shape: f32[1,16], index: 2, kind: input, shape index: {}]
  %s3 = inlined_call_operand.vmem [shape: f32[16,8], index: 3, kind: input, shape index: {}]
  %s4 = inlined_call_operand.vmem [shape: f32[1,8], index: 4, kind: input, shape index: {}]
  %s5 = inlined_call_operand.vmem [shape: f32[8,4], index: 5, kind: input, shape index: {}]
  %s6 = inlined_call_operand.vmem [shape: f32[1,4], index: 6, kind: input, shape index: {}]
  %s7 = inlined_call_operand.vmem [shape: f32[4,1], index: 7, kind: input, shape index: {}]
  %s8 = inlined_call_operand.<no memory space> [shape: f32[1,1], index: 8, kind: input, shape index: {}]
  %s9 = inlined_call_operand.vmem [shape: f32[8,1], index: 9, kind: output, shape index: {}]
  %s10 = sld [smem:[#allocation0]]
  $region46: #{tpu_custom_call.1} parent=0
    _
  %s12 = ssub.s32 1, %s10
  %s13 = scalar_select 0, %s12, %s10
  %v14 = vstv %s8
  %15 = vst [vmem:[#allocation2] sm:$0x1] %v14
  // Predicated region
  $region2: #{tpu_custom_call.1} parent=0 // pred_check
    _
  $region3: #{tpu_custom_call.1} parent=0 // pred_check_branch
    %17 = sbr.rel (0) target = $region5
  $region4: #{tpu_custom_call.1} parent=0 // pred_region
    _
  $region5: #{tpu_custom_call.1} parent=0 // pred_fallthru
    _
  // Predicated region
  $region6: #{tpu_custom_call.1} parent=0 // pred_check
    _
  $region7: #{tpu_custom_call.1} parent=0 // pred_check_branch
    %19 = sbr.rel (0) target = $region9
  $region8: #{tpu_custom_call.1} parent=0 // pred_region
    _
  $region9: #{tpu_custom_call.1} parent=0 // pred_fallthru
    _
  // Predicated region
  $region10: #{tpu_custom_call.1} parent=0 // pred_check
    _
  $region11: #{tpu_custom_call.1} parent=0 // pred_check_branch
    %21 = sbr.rel (0) target = $region13
  $region12: #{tpu_custom_call.1} parent=0 // pred_region
    _
  $region13: #{tpu_custom_call.1} parent=0 // pred_fallthru
    _
  // Predicated region
  $region14: #{tpu_custom_call.1} parent=0 // pred_check
    _
  $region15: #{tpu_custom_call.1} parent=0 // pred_check_branch
    %23 = sbr.rel (0) target = $region17
  $region16: #{tpu_custom_call.1} parent=0 // pred_region
    _
  $region17: #{tpu_custom_call.1} parent=0 // pred_fallthru
    _
  // Predicated region
  $region18: #{tpu_custom_call.1} parent=0 // pred_check
    _
  $region19: #{tpu_custom_call.1} parent=0 // pred_check_branch
    %25 = sbr.rel (0) target = $region21
  $region20: #{tpu_custom_call.1} parent=0 // pred_region
    _
  $region21: #{tpu_custom_call.1} parent=0 // pred_fallthru
    _
  // Predicated region
  $region22: #{tpu_custom_call.1} parent=0 // pred_check
    _
  $region23: #{tpu_custom_call.1} parent=0 // pred_check_branch
    %27 = sbr.rel (0) target = $region25
  $region24: #{tpu_custom_call.1} parent=0 // pred_region
    _
  $region25: #{tpu_custom_call.1} parent=0 // pred_fallthru
    _
  // Predicated region
  $region26: #{tpu_custom_call.1} parent=0 // pred_check
    _
  $region27: #{tpu_custom_call.1} parent=0 // pred_check_branch
    %29 = sbr.rel (0) target = $region29
  $region28: #{tpu_custom_call.1} parent=0 // pred_region
    _
  $region29: #{tpu_custom_call.1} parent=0 // pred_fallthru
    _
  // Predicated region
  $region30: #{tpu_custom_call.1} parent=0 // pred_check
    _
  $region31: #{tpu_custom_call.1} parent=0 // pred_check_branch
    %31 = sbr.rel (0) target = $region33
  $region32: #{tpu_custom_call.1} parent=0 // pred_region
    _
  $region33: #{tpu_custom_call.1} parent=0 // pred_fallthru
    _
  // Predicated region
  $region34: #{tpu_custom_call.1} parent=0 // pred_check
    _
  $region35: #{tpu_custom_call.1} parent=0 // pred_check_branch
    %33 = sbr.rel (0) target = $region37
  $region36: #{tpu_custom_call.1} parent=0 // pred_region
    _
  $region37: #{tpu_custom_call.1} parent=0 // pred_fallthru
    _
  %v34 = vld [vmem:[%s0] sm:$0xff]
  %v35 = vld [vmem:[%s1] sm:$0xff]
  %v36 = vld [vmem:[%s1 + $0x8] sm:$0xff]
  %v37 = vld [vmem:[%s1 + $0x10] sm:$0xff]
  %v38 = vld [vmem:[%s1 + $0x18] sm:$0xff]
  %v39 = vld [vmem:[%s1 + $0x20] sm:$0xff]
  %v40 = vld [vmem:[%s1 + $0x28] sm:$0xff]
  %v41 = vld [vmem:[%s1 + $0x30] sm:$0xff]
  %v42 = vld [vmem:[%s1 + $0x38] sm:$0xff]
  %v43 = vld [vmem:[%s2] sm:$0x1]
  %v45 = vlaneseq
  %v46 = vshrl.u32 %v45, 7
  %v47 = vsub.s32 0, %v46
  %v48 = vrot.slane %v43, %v47
  %vm50 = vcmask 523264
  %v52 = vsel %vm50, %v34, 0
  %54 = vmatprep.subr.mxu0 0.0
  %55 = vmatpush1.msra.mxu0 %v35
  %56 = vmatprep.subr.mxu0 0.0
  %57 = vmatpush1.msra.mxu0 %v36
  %58 = vmatprep.subr.mxu0 0.0
  %59 = vmatpush1.msra.mxu0 %v37
  %60 = vmatprep.subr.mxu0 0.0
  %61 = vmatpush1.msra.mxu0 %v38
  %62 = vmatprep.subr.mxu0 0.0
  %63 = vmatpush1.msra.mxu0 %v39
  %64 = vmatprep.subr.mxu0 0.0
  %65 = vmatpush1.msra.mxu0 %v40
  %66 = vmatprep.subr.mxu0 0.0
  %67 = vmatpush1.msra.mxu0 %v41
  %68 = vmatprep.subr.mxu0 0.0
  %69 = vmatpush1.msra.mxu0 %v42
  %70 = vmatprep.subr.mxu0 0.0
  %71 = vmatpush1.msra.mxu0 0.0
  %72 = vmatprep.subr.mxu0 0.0
  %73 = vmatpush1.msra.mxu0 0.0
  %74 = vmatprep.subr.mxu0 0.0
  %75 = vmatpush1.msra.mxu0 0.0
  %76 = vmatprep.subr.mxu0 0.0
  %77 = vmatpush1.msra.mxu0 0.0
  %78 = vmatprep.subr.mxu0 0.0
  %79 = vmatpush1.msra.mxu0 0.0
  %80 = vmatprep.subr.mxu0 0.0
  %81 = vmatpush1.msra.mxu0 0.0
  %82 = vmatprep.subr.mxu0 0.0
  %83 = vmatpush1.msra.mxu0 0.0
  %84 = vmatprep.subr.mxu0 0.0
  %85 = vmatpush1.msra.mxu0 0.0
  %86 = vmatprep.subr.mxu0 0.0
  %87 = vmatpush1.msra.mxu0 0.0
  %88 = vmatprep.subr.mxu0 0.0
  %89 = vmatpush1.msra.mxu0 0.0
  %90 = vmatprep.subr.mxu0 0.0
  %91 = vmatpush1.msra.mxu0 0.0
  %92 = vmatprep.subr.mxu0 0.0
  %93 = vmatpush1.msra.mxu0 0.0
  %94 = vmatprep.subr.mxu0 0.0
  %95 = vmatpush1.msra.mxu0 0.0
  %96 = vmatprep.subr.mxu0 0.0
  %97 = vmatpush1.msra.mxu0 0.0
  %98 = vmatprep.subr.mxu0 0.0
  %99 = vmatpush1.msra.mxu0 0.0
  %100 = vmatprep.subr.mxu0 0.0
  %101 = vmatpush1.msra.mxu0 0.0
  %102 = vmatprep.subr.mxu0 0.0
  %103 = vmatpush1.msra.mxu0 0.0
  %104 = vmatprep.subr.mxu0 0.0
  %105 = vmatpush1.msra.mxu0 0.0
  %106 = vmatprep.subr.mxu0 0.0
  %107 = vmatpush1.msra.mxu0 0.0
  %108 = vmatprep.subr.mxu0 0.0
  %109 = vmatpush1.msra.mxu0 0.0
  %110 = vmatprep.subr.mxu0 0.0
  %111 = vmatpush1.msra.mxu0 0.0
  %112 = vmatprep.subr.mxu0 0.0
  %113 = vmatpush1.msra.mxu0 0.0
  %114 = vmatprep.subr.mxu0 0.0
  %115 = vmatpush1.msra.mxu0 0.0
  %116 = vmatprep.subr.mxu0 0.0
  %117 = vmatpush1.msra.mxu0 0.0
  %118 = vmatprep.mubr.f32.mxu0 0.0
  %119 = vmatmul.mubr.f32.gmra.mrb[0].mxu0 %v52
  %v120 = vpop.f32.mrb[0].mxu0
  %v121 = vadd.f32 %v48, %v120
  %v122 = vpop.f32.mrb[0].mxu0
  %123 = vdwg.mxu0
  %v124 = vmax.f32 %v121, 0.0
  %v125 = vld [vmem:[%s3] sm:$0xff]
  %v126 = vld [vmem:[%s3 + $0x8] sm:$0xff]
  %v127 = vld [vmem:[%s4] sm:$0x1]
  %v129 = vlaneseq
  %v130 = vshrl.u32 %v129, 7
  %v131 = vsub.s32 0, %v130
  %v132 = vrot.slane %v127, %v131
  %vm134 = vcmask 130048
  %v136 = vsel %vm134, %v124, 0
  %138 = vmatprep.subr.mxu0 0.0
  %139 = vmatpush1.msra.mxu0 %v125
  %140 = vmatprep.subr.mxu0 0.0
  %141 = vmatpush1.msra.mxu0 %v126
  %142 = vmatprep.subr.mxu0 0.0
  %143 = vmatpush1.msra.mxu0 0.0
  %144 = vmatprep.subr.mxu0 0.0
  %145 = vmatpush1.msra.mxu0 0.0
  %146 = vmatprep.subr.mxu0 0.0
  %147 = vmatpush1.msra.mxu0 0.0
  %148 = vmatprep.subr.mxu0 0.0
  %149 = vmatpush1.msra.mxu0 0.0
  %150 = vmatprep.subr.mxu0 0.0
  %151 = vmatpush1.msra.mxu0 0.0
  %152 = vmatprep.subr.mxu0 0.0
  %153 = vmatpush1.msra.mxu0 0.0
  %154 = vmatprep.subr.mxu0 0.0
  %155 = vmatpush1.msra.mxu0 0.0
  %156 = vmatprep.subr.mxu0 0.0
  %157 = vmatpush1.msra.mxu0 0.0
  %158 = vmatprep.subr.mxu0 0.0
  %159 = vmatpush1.msra.mxu0 0.0
  %160 = vmatprep.subr.mxu0 0.0
  %161 = vmatpush1.msra.mxu0 0.0
  %162 = vmatprep.subr.mxu0 0.0
  %163 = vmatpush1.msra.mxu0 0.0
  %164 = vmatprep.subr.mxu0 0.0
  %165 = vmatpush1.msra.mxu0 0.0
  %166 = vmatprep.subr.mxu0 0.0
  %167 = vmatpush1.msra.mxu0 0.0
  %168 = vmatprep.subr.mxu0 0.0
  %169 = vmatpush1.msra.mxu0 0.0
  %170 = vmatprep.subr.mxu0 0.0
  %171 = vmatpush1.msra.mxu0 0.0
  %172 = vmatprep.subr.mxu0 0.0
  %173 = vmatpush1.msra.mxu0 0.0
  %174 = vmatprep.subr.mxu0 0.0
  %175 = vmatpush1.msra.mxu0 0.0
  %176 = vmatprep.subr.mxu0 0.0
  %177 = vmatpush1.msra.mxu0 0.0
  %178 = vmatprep.subr.mxu0 0.0
  %179 = vmatpush1.msra.mxu0 0.0
  %180 = vmatprep.subr.mxu0 0.0
  %181 = vmatpush1.msra.mxu0 0.0
  %182 = vmatprep.subr.mxu0 0.0
  %183 = vmatpush1.msra.mxu0 0.0
  %184 = vmatprep.subr.mxu0 0.0
  %185 = vmatpush1.msra.mxu0 0.0
  %186 = vmatprep.subr.mxu0 0.0
  %187 = vmatpush1.msra.mxu0 0.0
  %188 = vmatprep.subr.mxu0 0.0
  %189 = vmatpush1.msra.mxu0 0.0
  %190 = vmatprep.subr.mxu0 0.0
  %191 = vmatpush1.msra.mxu0 0.0
  %192 = vmatprep.subr.mxu0 0.0
  %193 = vmatpush1.msra.mxu0 0.0
  %194 = vmatprep.subr.mxu0 0.0
  %195 = vmatpush1.msra.mxu0 0.0
  %196 = vmatprep.subr.mxu0 0.0
  %197 = vmatpush1.msra.mxu0 0.0
  %198 = vmatprep.subr.mxu0 0.0
  %199 = vmatpush1.msra.mxu0 0.0
  %200 = vmatprep.subr.mxu0 0.0
  %201 = vmatpush1.msra.mxu0 0.0
  %202 = vmatprep.mubr.f32.mxu0 0.0
  %203 = vmatmul.mubr.f32.gmra.mrb[0].mxu0 %v136
  %v204 = vpop.f32.mrb[0].mxu0
  %v205 = vadd.f32 %v132, %v204
  %v206 = vpop.f32.mrb[0].mxu0
  %207 = vdwg.mxu0
  %v208 = vmax.f32 %v205, 0.0
  %v209 = vld [vmem:[%s5] sm:$0xff]
  %v210 = vld [vmem:[%s6] sm:$0x1]
  %v212 = vlaneseq
  %v213 = vshrl.u32 %v212, 7
  %v214 = vsub.s32 0, %v213
  %v215 = vrot.slane %v210, %v214
  %vm217 = vcmask 64512
  %v219 = vsel %vm217, %v208, 0
  %221 = vmatprep.subr.mxu0 0.0
  %222 = vmatpush1.msra.mxu0 %v209
  %223 = vmatprep.subr.mxu0 0.0
  %224 = vmatpush1.msra.mxu0 0.0
  %225 = vmatprep.subr.mxu0 0.0
  %226 = vmatpush1.msra.mxu0 0.0
  %227 = vmatprep.subr.mxu0 0.0
  %228 = vmatpush1.msra.mxu0 0.0
  %229 = vmatprep.subr.mxu0 0.0
  %230 = vmatpush1.msra.mxu0 0.0
  %231 = vmatprep.subr.mxu0 0.0
  %232 = vmatpush1.msra.mxu0 0.0
  %233 = vmatprep.subr.mxu0 0.0
  %234 = vmatpush1.msra.mxu0 0.0
  %235 = vmatprep.subr.mxu0 0.0
  %236 = vmatpush1.msra.mxu0 0.0
  %237 = vmatprep.subr.mxu0 0.0
  %238 = vmatpush1.msra.mxu0 0.0
  %239 = vmatprep.subr.mxu0 0.0
  %240 = vmatpush1.msra.mxu0 0.0
  %241 = vmatprep.subr.mxu0 0.0
  %242 = vmatpush1.msra.mxu0 0.0
  %243 = vmatprep.subr.mxu0 0.0
  %244 = vmatpush1.msra.mxu0 0.0
  %245 = vmatprep.subr.mxu0 0.0
  %246 = vmatpush1.msra.mxu0 0.0
  %247 = vmatprep.subr.mxu0 0.0
  %248 = vmatpush1.msra.mxu0 0.0
  %249 = vmatprep.subr.mxu0 0.0
  %250 = vmatpush1.msra.mxu0 0.0
  %251 = vmatprep.subr.mxu0 0.0
  %252 = vmatpush1.msra.mxu0 0.0
  %253 = vmatprep.subr.mxu0 0.0
  %254 = vmatpush1.msra.mxu0 0.0
  %255 = vmatprep.subr.mxu0 0.0
  %256 = vmatpush1.msra.mxu0 0.0
  %257 = vmatprep.subr.mxu0 0.0
  %258 = vmatpush1.msra.mxu0 0.0
  %259 = vmatprep.subr.mxu0 0.0
  %260 = vmatpush1.msra.mxu0 0.0
  %261 = vmatprep.subr.mxu0 0.0
  %262 = vmatpush1.msra.mxu0 0.0
  %263 = vmatprep.subr.mxu0 0.0
  %264 = vmatpush1.msra.mxu0 0.0
  %265 = vmatprep.subr.mxu0 0.0
  %266 = vmatpush1.msra.mxu0 0.0
  %267 = vmatprep.subr.mxu0 0.0
  %268 = vmatpush1.msra.mxu0 0.0
  %269 = vmatprep.subr.mxu0 0.0
  %270 = vmatpush1.msra.mxu0 0.0
  %271 = vmatprep.subr.mxu0 0.0
  %272 = vmatpush1.msra.mxu0 0.0
  %273 = vmatprep.subr.mxu0 0.0
  %274 = vmatpush1.msra.mxu0 0.0
  %275 = vmatprep.subr.mxu0 0.0
  %276 = vmatpush1.msra.mxu0 0.0
  %277 = vmatprep.subr.mxu0 0.0
  %278 = vmatpush1.msra.mxu0 0.0
  %279 = vmatprep.subr.mxu0 0.0
  %280 = vmatpush1.msra.mxu0 0.0
  %281 = vmatprep.subr.mxu0 0.0
  %282 = vmatpush1.msra.mxu0 0.0
  %283 = vmatprep.subr.mxu0 0.0
  %284 = vmatpush1.msra.mxu0 0.0
  %285 = vmatprep.mubr.f32.mxu0 0.0
  %286 = vmatmul.mubr.f32.gmra.mrb[0].mxu0 %v219
  %v287 = vpop.f32.mrb[0].mxu0
  %v288 = vadd.f32 %v215, %v287
  %v289 = vpop.f32.mrb[0].mxu0
  %290 = vdwg.mxu0
  %v291 = vmax.f32 %v288, 0.0
  %v292 = vld [vmem:[%s7] sm:$0xf]
  %v293 = vld [vmem:[#allocation2] sm:$0x1]
  %v295 = vlaneseq
  %v296 = vshrl.u32 %v295, 7
  %v297 = vsub.s32 0, %v296
  %v298 = vrot.slane %v293, %v297
  %vm300 = vcmask 31744
  %v302 = vsel %vm300, %v291, 0
  %vm304 = vcmask 1043456
  %v306 = vsel %vm304, %v292, 0
  %308 = vmatprep.subr.mxu0 0.0
  %309 = vmatpush1.msra.mxu0 %v306
  %310 = vmatprep.subr.mxu0 0.0
  %311 = vmatpush1.msra.mxu0 0.0
  %312 = vmatprep.subr.mxu0 0.0
  %313 = vmatpush1.msra.mxu0 0.0
  %314 = vmatprep.subr.mxu0 0.0
  %315 = vmatpush1.msra.mxu0 0.0
  %316 = vmatprep.subr.mxu0 0.0
  %317 = vmatpush1.msra.mxu0 0.0
  %318 = vmatprep.subr.mxu0 0.0
  %319 = vmatpush1.msra.mxu0 0.0
  %320 = vmatprep.subr.mxu0 0.0
  %321 = vmatpush1.msra.mxu0 0.0
  %322 = vmatprep.subr.mxu0 0.0
  %323 = vmatpush1.msra.mxu0 0.0
  %324 = vmatprep.subr.mxu0 0.0
  %325 = vmatpush1.msra.mxu0 0.0
  %326 = vmatprep.subr.mxu0 0.0
  %327 = vmatpush1.msra.mxu0 0.0
  %328 = vmatprep.subr.mxu0 0.0
  %329 = vmatpush1.msra.mxu0 0.0
  %330 = vmatprep.subr.mxu0 0.0
  %331 = vmatpush1.msra.mxu0 0.0
  %332 = vmatprep.subr.mxu0 0.0
  %333 = vmatpush1.msra.mxu0 0.0
  %334 = vmatprep.subr.mxu0 0.0
  %335 = vmatpush1.msra.mxu0 0.0
  %336 = vmatprep.subr.mxu0 0.0
  %337 = vmatpush1.msra.mxu0 0.0
  %338 = vmatprep.subr.mxu0 0.0
  %339 = vmatpush1.msra.mxu0 0.0
  %340 = vmatprep.subr.mxu0 0.0
  %341 = vmatpush1.msra.mxu0 0.0
  %342 = vmatprep.subr.mxu0 0.0
  %343 = vmatpush1.msra.mxu0 0.0
  %344 = vmatprep.subr.mxu0 0.0
  %345 = vmatpush1.msra.mxu0 0.0
  %346 = vmatprep.subr.mxu0 0.0
  %347 = vmatpush1.msra.mxu0 0.0
  %348 = vmatprep.subr.mxu0 0.0
  %349 = vmatpush1.msra.mxu0 0.0
  %350 = vmatprep.subr.mxu0 0.0
  %351 = vmatpush1.msra.mxu0 0.0
  %352 = vmatprep.subr.mxu0 0.0
  %353 = vmatpush1.msra.mxu0 0.0
  %354 = vmatprep.subr.mxu0 0.0
  %355 = vmatpush1.msra.mxu0 0.0
  %356 = vmatprep.subr.mxu0 0.0
  %357 = vmatpush1.msra.mxu0 0.0
  %358 = vmatprep.subr.mxu0 0.0
  %359 = vmatpush1.msra.mxu0 0.0
  %360 = vmatprep.subr.mxu0 0.0
  %361 = vmatpush1.msra.mxu0 0.0
  %362 = vmatprep.subr.mxu0 0.0
  %363 = vmatpush1.msra.mxu0 0.0
  %364 = vmatprep.subr.mxu0 0.0
  %365 = vmatpush1.msra.mxu0 0.0
  %366 = vmatprep.subr.mxu0 0.0
  %367 = vmatpush1.msra.mxu0 0.0
  %368 = vmatprep.subr.mxu0 0.0
  %369 = vmatpush1.msra.mxu0 0.0
  %370 = vmatprep.subr.mxu0 0.0
  %371 = vmatpush1.msra.mxu0 0.0
  %372 = vmatprep.mubr.f32.mxu0 0.0
  %373 = vmatmul.mubr.f32.gmra.mrb[0].mxu0 %v302
  %v374 = vpop.f32.mrb[0].mxu0
  %v375 = vadd.f32 %v298, %v374
  %v376 = vpop.f32.mrb[0].mxu0
  %377 = vdwg.mxu0
  %v378 = vmax.f32 %v375, 0.0
  %vm379 = vcmask 7168
  %380 = vst.msk [vmem:[%s9] sm:$0xff] %vm379, %v378
  // Predicated region
  $region38: #{tpu_custom_call.1} parent=0 // pred_check
    _
  $region39: #{tpu_custom_call.1} parent=0 // pred_check_branch
    %382 = sbr.rel (0) target = $region41
  $region40: #{tpu_custom_call.1} parent=0 // pred_region
    _
  $region41: #{tpu_custom_call.1} parent=0 // pred_fallthru
    _
  // Predicated region
  $region42: #{tpu_custom_call.1} parent=0 // pred_check
    _
  $region43: #{tpu_custom_call.1} parent=0 // pred_check_branch
    %384 = sbr.rel (0) target = $region45
  $region44: #{tpu_custom_call.1} parent=0 // pred_region
    _
  $region45: #{tpu_custom_call.1} parent=0 // pred_fallthru
    _

</llo_original>
